<compile_context>
chip_gen: v5e
topology: v5e:2x2
jax: 0.10.0
libtpu: 0.0.40
codegen_flags: <defaults>
</compile_context>

<pallas_src>
import math

import jax
import jax.numpy as jnp
from jax.experimental import pallas as pl
from jax.experimental.pallas import tpu as pltpu


def _round_up(v: int, m: int) -> int:
    return ((v + m - 1) // m) * m


def _fourier_kernel(x_ref, f2_ref, b_ref, o_ref):
    # MXU matmul (tiny K -> low MXU util, but still far cheaper than a VPU
    # dot) -> VPU add + sin -> one lane-dense (tm, 2F) store.
    ang = jnp.dot(x_ref[...], f2_ref[...], preferred_element_type=jnp.float32)
    o_ref[...] = jnp.sin(ang + b_ref[...]).astype(o_ref.dtype)


# Per-step VMEM tile budget used to clamp tm, and the scoped-VMEM limit we
# request.  24 MiB of tiles + tiny resident freqs2/bias fits comfortably in a
# 32 MiB scoped limit, which is safe on all of v5e/v6e (128 MiB physical) and
# v7x (64 MiB physical).
_VMEM_TILE_BUDGET = 24 << 20
_VMEM_LIMIT_BYTES = 32 << 20
_MIN_TM = 512  # don't shrink large tiles below this when chasing >=4 grid steps


def fourier_layer(
    x: jax.Array,
    freqs: jax.Array,
    *,
    tm: int = 8192,
    out_dtype=jnp.float32,
) -> jax.Array:
    """Pallas implementation of FourierLayer.forward(x, freqs).

    x:     [N, in_features] float32
    freqs: [in_features, F] float32
    returns [N, 2*F]  (sin(2*pi*x@freqs) in [:, :F], cos in [:, F:])
    """
    n, k = x.shape
    k2, f = freqs.shape
    assert k == k2, "inner dims must match"
    two_f = 2 * f
    # NOTE: keep 2F a multiple of 128 (F multiple of 64) for unmasked,
    # lane-dense output stores; other F still works, just with masked stores.

    # Pre-widen + pre-scale the frequencies once in the wrapper:
    #   angle = x @ (2*pi*[freqs | freqs]) + [0..0, pi/2..pi/2]
    # so sin(angle) yields [sin(2*pi*xh), cos(2*pi*xh)] directly.
    freqs2 = ((2.0 * math.pi) * jnp.concatenate([freqs, freqs], axis=-1)).astype(
        jnp.float32
    )
    bias = jnp.concatenate(
        [
            jnp.zeros((1, f), dtype=jnp.float32),
            jnp.full((1, f), 0.5 * math.pi, dtype=jnp.float32),
        ],
        axis=-1,
    )

    out_bytes = jnp.dtype(out_dtype).itemsize

    # --- row-tile sizing --------------------------------------------------
    # Per-step VMEM: 2x x tile (lane-padded to >=128 lanes, double-buffered)
    #              + 2x out tile (double-buffered)
    #              + (tm, 2F) f32 matmul accumulator.
    k_lanes = max(128, _round_up(k, 128))
    bytes_per_row = 2 * k_lanes * 4 + 2 * two_f * out_bytes + two_f * 4
    tm_budget = max(8, (_VMEM_TILE_BUDGET // bytes_per_row) // 8 * 8)
    tm = max(8, min((tm // 8) * 8, tm_budget))

    tm_eff = min(tm, _round_up(n, 8))
    # v7x has 2 TensorCores: keep >=4 steps on the "parallel" grid axis for
    # large inputs so both cores are fed (no-op on single-core v5e/v6e, and
    # we never shrink below _MIN_TM so per-step overhead stays amortized).
    while pl.cdiv(n, tm_eff) < 4 and tm_eff >= 2 * _MIN_TM:
        tm_eff = _round_up(tm_eff // 2, 8)

    grid = (pl.cdiv(n, tm_eff),)

    cost = pl.CostEstimate(
        flops=2 * n * k * two_f,
        transcendentals=n * two_f,
        bytes_accessed=n * k * 4 + k * two_f * 4 + n * two_f * out_bytes,
    )

    # No pad / output slice for ragged N: Pallas clips the partial last block
    # (overhang reads are garbage but feed only masked-out rows; no cross-row
    # reduction exists in the kernel, so valid rows are unaffected).
    return pl.pallas_call(
        _fourier_kernel,
        out_shape=jax.ShapeDtypeStruct((n, two_f), out_dtype),
        grid_spec=pltpu.PrefetchScalarGridSpec(
            num_scalar_prefetch=0,
            grid=grid,
            in_specs=[
                # tile rows of x; freqs2/bias are tiny, block-invariant, resident
                pl.BlockSpec((tm_eff, k), lambda i: (i, 0)),
                pl.BlockSpec((k, two_f), lambda i: (0, 0)),
                pl.BlockSpec((1, two_f), lambda i: (0, 0)),
            ],
            out_specs=pl.BlockSpec((tm_eff, two_f), lambda i: (i, 0)),
        ),
        compiler_params=pltpu.CompilerParams(
            dimension_semantics=("parallel",),
            vmem_limit_bytes=_VMEM_LIMIT_BYTES,
        ),
        cost_estimate=cost,
    )(x.astype(jnp.float32), freqs2, bias)


def fourier_layer_ref(x: jax.Array, freqs: jax.Array) -> jax.Array:
    x_hat = x @ freqs
    return jnp.concatenate(
        [jnp.sin(2.0 * math.pi * x_hat), jnp.cos(2.0 * math.pi * x_hat)],
        axis=-1,
    )


if __name__ == "__main__":
    key = jax.random.PRNGKey(0)
    kx, kf = jax.random.split(key)

    # in_features = 8, F (number of frequencies) = 64, batch of 16 points.
    n, in_features, num_freqs = 16, 8, 64
    x = jax.random.normal(kx, (n, in_features), dtype=jnp.float32)
    freqs = jax.random.normal(kf, (in_features, num_freqs), dtype=jnp.float32)

    out = jax.block_until_ready(fourier_layer(x, freqs))
    ref = fourier_layer_ref(x, freqs)
    assert out.shape == (n, 2 * num_freqs)
    assert jnp.allclose(out, ref, atol=1e-4, rtol=1e-4)

    # Ragged-N, multi-step grid path (partial last block, masked stores).
    n2 = 20
    x2 = jax.random.normal(kx, (n2, in_features), dtype=jnp.float32)
    out2 = jax.block_until_ready(fourier_layer(x2, freqs, tm=8))
    ref2 = fourier_layer_ref(x2, freqs)
    assert out2.shape == (n2, 2 * num_freqs)
    assert jnp.allclose(out2, ref2, atol=1e-4, rtol=1e-4)

    # Opt-in bf16 output (halves the dominant HBM store stream on v5e/v6e).
    out3 = jax.block_until_ready(fourier_layer(x, freqs, out_dtype=jnp.bfloat16))
    assert out3.shape == (n, 2 * num_freqs)
    assert jnp.allclose(out3.astype(jnp.float32), ref, atol=2e-2, rtol=2e-2)

    print("KERNEL_OK")
</pallas_src>

<mosaic_0001>
module attributes {stable_mosaic.version = 11 : i64} {
  func.func @_fourier_kernel(%arg0: i32, %arg1: memref<16x8xf32, #tpu.memory_space<vmem>>, %arg2: memref<8x128xf32, #tpu.memory_space<vmem>>, %arg3: memref<1x128xf32, #tpu.memory_space<vmem>>, %arg4: memref<16x128xf32, #tpu.memory_space<vmem>>) attributes {dimension_semantics = [#tpu.dimension_semantics<parallel>], iteration_bounds = array<i64: 1>, scalar_prefetch = 0 : i64, scratch_operands = 0 : i64, tpu.core_type = #tpu.core_type<tc>, window_params = [{transform_indices = @transform_0, window_bounds = array<i64: 16, 8>}, {pipeline_mode = #tpu.pipeline_mode<synchronous>, transform_indices = @transform_1, window_bounds = array<i64: 8, 128>}, {pipeline_mode = #tpu.pipeline_mode<synchronous>, transform_indices = @transform_2, window_bounds = array<i64: 1, 128>}, {transform_indices = @transform_3, window_bounds = array<i64: 16, 128>}]} {
    %c0 = arith.constant 0 : index
    %c0_0 = arith.constant 0 : index
    %0 = vector.load %arg1[%c0, %c0_0] : memref<16x8xf32, #tpu.memory_space<vmem>>, vector<16x8xf32>
    %c0_1 = arith.constant 0 : index
    %c0_2 = arith.constant 0 : index
    %1 = vector.load %arg2[%c0_1, %c0_2] : memref<8x128xf32, #tpu.memory_space<vmem>>, vector<8x128xf32>
    %cst = arith.constant dense<0.000000e+00> : vector<16x128xf32>
    %2 = tpu.matmul %0, %1, %cst {dimension_numbers = #tpu.dot_dimension_numbers<[1], [0], [0], [1], [0, 0, 1, 1], [], []>} : vector<16x8xf32>, vector<8x128xf32>, vector<16x128xf32> -> vector<16x128xf32>
    %c0_3 = arith.constant 0 : index
    %c0_4 = arith.constant 0 : index
    %3 = vector.load %arg3[%c0_3, %c0_4] : memref<1x128xf32, #tpu.memory_space<vmem>>, vector<1x128xf32>
    %4 = vector.broadcast %3 : vector<1x128xf32> to vector<16x128xf32>
    %5 = arith.addf %2, %4 : vector<16x128xf32>
    %6 = math.sin %5 : vector<16x128xf32>
    %c0_5 = arith.constant 0 : index
    %c0_6 = arith.constant 0 : index
    %7 = vector.load %arg4[%c0_5, %c0_6] : memref<16x128xf32, #tpu.memory_space<vmem>>, vector<16x128xf32>
    tpu.vector_store %arg4[%c0_5, %c0_6], %6 {strides = array<i32>} : memref<16x128xf32, #tpu.memory_space<vmem>>, vector<16x128xf32>,
    return
  }
  func.func @transform_0(%arg0: i32) -> (i32, i32) {
    %c0_i32 = arith.constant 0 : i32
    %c0_i32_0 = arith.constant 0 : i32
    return %arg0, %c0_i32 : i32, i32
  }
  func.func @transform_1(%arg0: i32) -> (i32, i32) {
    %c0_i32 = arith.constant 0 : i32
    %c0_i32_0 = arith.constant 0 : i32
    %c0_i32_1 = arith.constant 0 : i32
    return %c0_i32, %c0_i32_0 : i32, i32
  }
  func.func @transform_2(%arg0: i32) -> (i32, i32) {
    %c0_i32 = arith.constant 0 : i32
    %c0_i32_0 = arith.constant 0 : i32
    %c0_i32_1 = arith.constant 0 : i32
    return %c0_i32, %c0_i32_0 : i32, i32
  }
  func.func @transform_3(%arg0: i32) -> (i32, i32) {
    %c0_i32 = arith.constant 0 : i32
    %c0_i32_0 = arith.constant 0 : i32
    return %arg0, %c0_i32 : i32, i32
  }
}

</mosaic_0001>

<llo_original>
// kernel: tpu_custom_call.1
$region0: #{tpu_custom_call.1}
  #allocation0 [shape = 'u32[]', space=smem, size = 0x4, offset = 0x4, fixed_abs, tag = 'smem constant byte address 0x4 - core index']
  #allocation1 [shape = 'u32[72,128]{1,0:T(1,128)}', space=vmem, size = 0x9000, scoped, tag = 'internal scratch']
  %s0 = inlined_call_operand.vmem [shape: f32[16,8], index: 0, kind: input, shape index: {}]
  %s1 = inlined_call_operand.vmem [shape: f32[8,128], index: 1, kind: input, shape index: {}]
  %s2 = inlined_call_operand.vmem [shape: f32[1,128], index: 2, kind: input, shape index: {}]
  %s3 = inlined_call_operand.hbm [shape: f32[16,128], index: 3, kind: output, shape index: {}]
  %s4 = sld [smem:[#allocation0]]
  $region22: #{tpu_custom_call.1} parent=0
    _
  %s6 = ssub.s32 1, %s4
  %s7 = scalar_select 0, %s6, %s4
  $region1: #{tpu_custom_call.1} parent=0
    #allocation2 [shape = 'u8[8192]{0}', space=vmem, size = 0x2000, scoped, tag = 'output window, operand 0, single buffered']
    #allocation3 [shape = 's32[1]{0}', space=sflag, size = 0x4, scoped, tag = 'scoped memory for tpu_custom_call.1']
    %8 = vsyncpa [#allocation3], 0
    // Predicated region
    $region2: #{tpu_custom_call.1} parent=1 // pred_check
      _
    $region3: #{tpu_custom_call.1} parent=1 // pred_check_branch
      %10 = sbr.rel (0) target = $region5
    $region4: #{tpu_custom_call.1} parent=1 // pred_region
      _
    $region5: #{tpu_custom_call.1} parent=1 // pred_fallthru
      _
    // Predicated region
    $region6: #{tpu_custom_call.1} parent=1 // pred_check
      _
    $region7: #{tpu_custom_call.1} parent=1 // pred_check_branch
      %12 = sbr.rel (0) target = $region9
    $region8: #{tpu_custom_call.1} parent=1 // pred_region
      _
    $region9: #{tpu_custom_call.1} parent=1 // pred_fallthru
      _
    // Predicated region
    $region10: #{tpu_custom_call.1} parent=1 // pred_check
      _
    $region11: #{tpu_custom_call.1} parent=1 // pred_check_branch
      %14 = sbr.rel (0) target = $region13
    $region12: #{tpu_custom_call.1} parent=1 // pred_region
      _
    $region13: #{tpu_custom_call.1} parent=1 // pred_fallthru
      _
    %v15 = vld [vmem:[%s0] sm:$0xff]
    %v16 = vld [vmem:[%s0 + $0x8] sm:$0xff]
    %v17 = vld [vmem:[%s1] sm:$0xff]
    %v18 = vld [vmem:[%s2] sm:$0x1]
    %v20 = vperm.slane %v18, 0
    %vm22 = vcmask 64512
    %v24 = vsel %vm22, %v15, 0
    %v27 = vsel %vm22, %v16, 0
    %29 = vmatpush.msra.mxu0 0.0
    %30 = vmatpush.msra.mxu0 0.0
    %31 = vmatpush.msra.mxu0 0.0
    %32 = vmatpush.msra.mxu0 0.0
    %33 = vmatpush.msra.mxu0 0.0
    %34 = vmatpush.msra.mxu0 0.0
    %35 = vmatpush.msra.mxu0 0.0
    %36 = vmatpush.msra.mxu0 0.0
    %37 = vmatpush.msra.mxu0 0.0
    %38 = vmatpush.msra.mxu0 0.0
    %39 = vmatpush.msra.mxu0 0.0
    %40 = vmatpush.msra.mxu0 0.0
    %41 = vmatpush.msra.mxu0 0.0
    %42 = vmatpush.msra.mxu0 0.0
    %43 = vmatpush.msra.mxu0 0.0
    %44 = vmatpush.msra.mxu0 %v17
    %45 = vmatmul.f32.gmra.mxu0 %v24
    %v46 = vpop.f32.mrf.mxu0
    %v47 = vadd.f32 %v20, %v46
    %48 = vmatmul.f32.gmra.mxu0 %v27
    %v49 = vpop.f32.mrf.mxu0
    %v50 = vadd.f32 %v20, %v49
    %51 = vdwg.mxu0
    %v52 = vand.u32 2147483647, %v47
    %vm53 = vcmp.le.f32.partialorder %v52, 0.7853982
    %vm54 = vcmp.lt.s32.totalorder %v47, 0
    %v55 = vand.u32 %v47, 2139095040
    %v56 = vshrl.u32 %v55, 23
    %v57 = vsub.s32 %v56, 127
    %v58 = vand.u32 2147483647, %v47
    %v59 = vand.u32 %v58, 8388607
    %v60 = vor.u32 %v59, 8388608
    %v61 = vsub.s32 0, %v60
    %v62 = vadd.s32 %v57, 1
    %vm63 = vcmp.gt.s32.totalorder %v62, 0
    %v64 = vsel %vm63, %v62, 0
    %v65 = vshrl.u32 %v64, 5
    %v66 = vand.u32 %v64, 31
    %v67 = vsub.s32 32, %v66
    %v68 = vshrl.u32 683565275, %v67
    %v69 = vshll.u32 683565275, %v66
    %v70 = vshrl.u32 2475754826, %v67
    %v71 = vor.u32 %v69, %v70
    %v72 = vshll.u32 2475754826, %v66
    %v73 = vshrl.u32 2131351028, %v67
    %v74 = vor.u32 %v72, %v73
    %v75 = vshll.u32 2131351028, %v66
    %v76 = vshrl.u32 2102212464, %v67
    %v77 = vor.u32 %v75, %v76
    %v78 = vshll.u32 2102212464, %v66
    %v79 = vshrl.u32 920167782, %v67
    %v80 = vor.u32 %v78, %v79
    %v81 = vshll.u32 920167782, %v66
    %v82 = vshrl.u32 1326507024, %v67
    %v83 = vor.u32 %v81, %v82
    %vm84 = vcmp.lt.s32.totalorder %v65, 1
    %vm85 = vcmp.lt.s32.totalorder %v65, 2
    %vm86 = vcmp.lt.s32.totalorder %v65, 3
    %vm87 = vcmp.lt.s32.totalorder %v65, 4
    %v88 = vsel %vm84, %v68, %v71
    %v89 = vsel %vm87, %v77, 2102212464
    %v90 = vsel %vm86, %v74, %v89
    %v91 = vsel %vm85, %v88, %v90
    %v92 = vsel %vm84, %v71, %v74
    %v93 = vsel %vm87, %v80, 920167782
    %v94 = vsel %vm86, %v77, %v93
    %v95 = vsel %vm85, %v92, %v94
    %v96 = vsel %vm84, %v74, %v77
    %v97 = vsel %vm87, %v83, 1326507024
    %v98 = vsel %vm86, %v80, %v97
    %v99 = vsel %vm85, %v96, %v98
    %v100 = vshll.u32 %v60, 8
    %v101 = vand.u32 %v100, 65535
    %v102 = vshrl.u32 %v100, 16
    %v103 = vand.u32 %v99, 65535
    %v104 = vshrl.u32 %v99, 16
    %v105 = vmul.u32 %v101, %v103
    %v106 = vmul.u32 %v101, %v104
    %v107 = vmul.u32 %v102, %v103
    %v108 = vmul.u32 %v102, %v104
    %v109 = vshll.u32 %v106, 16
    %v110 = vshrl.u32 %v106, 16
    %v111 = vshll.u32 %v107, 16
    %v112 = vshrl.u32 %v107, 16
    %vm113 = vc.u32 %v105, %v109
    %v114 = vsel %vm113, 1, 0
    %v115 = vadd.s32 %v105, %v109
    %v116 = vadd.s32 %v108, %v114
    %vm117 = vc.u32 %v115, %v111
    %v118 = vsel %vm117, 1, 0
    %v119 = vadd.s32 %v115, %v111
    %v120 = vadd.s32 %v116, %v118
    %v121 = vadd.s32 %v120, %v110
    %v122 = vadd.s32 %v121, %v112
    %v123 = vand.u32 %v100, 65535
    %v124 = vshrl.u32 %v100, 16
    %v125 = vand.u32 %v95, 65535
    %v126 = vshrl.u32 %v95, 16
    %v127 = vmul.u32 %v123, %v125
    %v128 = vmul.u32 %v123, %v126
    %v129 = vmul.u32 %v124, %v125
    %v130 = vmul.u32 %v124, %v126
    %v131 = vshll.u32 %v128, 16
    %v132 = vshrl.u32 %v128, 16
    %v133 = vshll.u32 %v129, 16
    %v134 = vshrl.u32 %v129, 16
    %vm135 = vc.u32 %v127, %v131
    %v136 = vsel %vm135, 1, 0
    %v137 = vadd.s32 %v127, %v131
    %v138 = vadd.s32 %v130, %v136
    %vm139 = vc.u32 %v137, %v133
    %v140 = vsel %vm139, 1, 0
    %v141 = vadd.s32 %v137, %v133
    %v142 = vadd.s32 %v138, %v140
    %v143 = vadd.s32 %v142, %v132
    %v144 = vadd.s32 %v143, %v134
    %v145 = vmul.u32 %v100, %v91
    %v146 = vadd.s32 %v122, %v141
    %vm147 = vc.u32 %v122, %v141
    %v148 = vadd.s32 %v144, 1
    %v149 = vsel %vm147, %v148, %v144
    %v150 = vadd.s32 %v145, %v149
    %v151 = vadd.s32 %v150, 536870912
    %v152 = vshrl.u32 %v151, 30
    %v153 = vshll.u32 %v152, 30
    %v154 = vsub.s32 %v150, %v153
    %vm155 = vcmp.lt.s32.totalorder %v154, 0
    %v156 = vsub.s32 0, %v154
    %v157 = vsel %vm155, %v156, %v154
    %v158 = vclz %v157
    %v159 = vsub.s32 %v158, 2
    %vm160 = vcmp.gt.s32.totalorder 0, %v159
    %v161 = vsel %vm160, 0, %v159
    %v162 = vsub.s32 32, %v161
    %v163 = vshll.u32 %v154, %v161
    %v164 = vshrl.u32 %v146, %v162
    %v165 = vor.u32 %v163, %v164
    %v166 = vsub.s32 4294967266, %v161
    %v167 = vadd.s32 %v166, 127
    %v168 = vshll.u32 %v167, 23
    %v169 = vor.u32 4788187, %v168
    %v170 = vand.u32 2147483647, %v169
    %v172 = vcvt.s32.f32 %v165
    %v173 = vmul.f32 %v172, %v170
    %v174 = vxor.u32 %v173, 2147483648
    %v175 = vsel %vm54, %v174, %v173
    %v176 = vsub.s32 4, %v152
    %v177 = vsel %vm54, %v176, %v152
    %v178 = vsel %vm53, %v47, %v175
    %v179 = vsel %vm53, 0, %v177
    %v180 = vmul.f32 %v178, %v178
    %v181 = vmul.f32 %v180, -0.001358992
    %v182 = vadd.f32 %v181, 0.041655596
    %v183 = vmul.f32 %v180, %v182
    %v184 = vadd.f32 %v183, -0.4999988
    %v185 = vmul.f32 %v180, %v184
    %v186 = vadd.f32 1.0, %v185
    %v187 = vmul.f32 %v178, %v178
    %v188 = vmul.f32 %v187, -0.00019511016
    %v189 = vadd.f32 %v188, 0.008332121
    %v190 = vmul.f32 %v187, %v189
    %v191 = vadd.f32 %v190, -0.16666654
    %v192 = vmul.f32 %v187, %v191
    %v193 = vadd.f32 %v192, 1.0
    %v194 = vmul.f32 %v193, %v178
    %vm195 = vweird.f32 %v47
    %v196 = vadd.s32 %v179, 3
    %v197 = vand.u32 %v196, 3
    %vm198 = vcmp.lt.s32.totalorder %v197, 2
    %vm199 = vcmp.eq.s32.totalorder %v197, 0
    %v200 = vxor.u32 %v194, 2147483648
    %v201 = vsel %vm199, %v186, %v200
    %vm202 = vcmp.eq.s32.totalorder %v197, 2
    %v203 = vxor.u32 %v186, 2147483648
    %v204 = vsel %vm202, %v203, %v194
    %v205 = vsel %vm198, %v201, %v204
    %v206 = vsel %vm195, nan, %v205
    %v207 = vand.u32 2147483647, %v50
    %vm208 = vcmp.le.f32.partialorder %v207, 0.7853982
    %vm209 = vcmp.lt.s32.totalorder %v50, 0
    %v210 = vand.u32 %v50, 2139095040
    %v211 = vshrl.u32 %v210, 23
    %v212 = vsub.s32 %v211, 127
    %v213 = vand.u32 2147483647, %v50
    %v214 = vand.u32 %v213, 8388607
    %v215 = vor.u32 %v214, 8388608
    %v216 = vsub.s32 0, %v215
    %v217 = vadd.s32 %v212, 1
    %vm218 = vcmp.gt.s32.totalorder %v217, 0
    %v219 = vsel %vm218, %v217, 0
    %v220 = vshrl.u32 %v219, 5
    %v221 = vand.u32 %v219, 31
    %v222 = vsub.s32 32, %v221
    %v223 = vshrl.u32 683565275, %v222
    %v224 = vshll.u32 683565275, %v221
    %v225 = vshrl.u32 2475754826, %v222
    %v226 = vor.u32 %v224, %v225
    %v227 = vshll.u32 2475754826, %v221
    %v228 = vshrl.u32 2131351028, %v222
    %v229 = vor.u32 %v227, %v228
    %v230 = vshll.u32 2131351028, %v221
    %v231 = vshrl.u32 2102212464, %v222
    %v232 = vor.u32 %v230, %v231
    %v233 = vshll.u32 2102212464, %v221
    %v234 = vshrl.u32 920167782, %v222
    %v235 = vor.u32 %v233, %v234
    %v236 = vshll.u32 920167782, %v221
    %v237 = vshrl.u32 1326507024, %v222
    %v238 = vor.u32 %v236, %v237
    %vm239 = vcmp.lt.s32.totalorder %v220, 1
    %vm240 = vcmp.lt.s32.totalorder %v220, 2
    %vm241 = vcmp.lt.s32.totalorder %v220, 3
    %vm242 = vcmp.lt.s32.totalorder %v220, 4
    %v243 = vsel %vm239, %v223, %v226
    %v244 = vsel %vm242, %v232, 2102212464
    %v245 = vsel %vm241, %v229, %v244
    %v246 = vsel %vm240, %v243, %v245
    %v247 = vsel %vm239, %v226, %v229
    %v248 = vsel %vm242, %v235, 920167782
    %v249 = vsel %vm241, %v232, %v248
    %v250 = vsel %vm240, %v247, %v249
    %v251 = vsel %vm239, %v229, %v232
    %v252 = vsel %vm242, %v238, 1326507024
    %v253 = vsel %vm241, %v235, %v252
    %v254 = vsel %vm240, %v251, %v253
    %v255 = vshll.u32 %v215, 8
    %v256 = vand.u32 %v255, 65535
    %v257 = vshrl.u32 %v255, 16
    %v258 = vand.u32 %v254, 65535
    %v259 = vshrl.u32 %v254, 16
    %v260 = vmul.u32 %v256, %v258
    %v261 = vmul.u32 %v256, %v259
    %v262 = vmul.u32 %v257, %v258
    %v263 = vmul.u32 %v257, %v259
    %v264 = vshll.u32 %v261, 16
    %v265 = vshrl.u32 %v261, 16
    %v266 = vshll.u32 %v262, 16
    %v267 = vshrl.u32 %v262, 16
    %vm268 = vc.u32 %v260, %v264
    %v269 = vsel %vm268, 1, 0
    %v270 = vadd.s32 %v260, %v264
    %v271 = vadd.s32 %v263, %v269
    %vm272 = vc.u32 %v270, %v266
    %v273 = vsel %vm272, 1, 0
    %v274 = vadd.s32 %v270, %v266
    %v275 = vadd.s32 %v271, %v273
    %v276 = vadd.s32 %v275, %v265
    %v277 = vadd.s32 %v276, %v267
    %v278 = vand.u32 %v255, 65535
    %v279 = vshrl.u32 %v255, 16
    %v280 = vand.u32 %v250, 65535
    %v281 = vshrl.u32 %v250, 16
    %v282 = vmul.u32 %v278, %v280
    %v283 = vmul.u32 %v278, %v281
    %v284 = vmul.u32 %v279, %v280
    %v285 = vmul.u32 %v279, %v281
    %v286 = vshll.u32 %v283, 16
    %v287 = vshrl.u32 %v283, 16
    %v288 = vshll.u32 %v284, 16
    %v289 = vshrl.u32 %v284, 16
    %vm290 = vc.u32 %v282, %v286
    %v291 = vsel %vm290, 1, 0
    %v292 = vadd.s32 %v282, %v286
    %v293 = vadd.s32 %v285, %v291
    %vm294 = vc.u32 %v292, %v288
    %v295 = vsel %vm294, 1, 0
    %v296 = vadd.s32 %v292, %v288
    %v297 = vadd.s32 %v293, %v295
    %v298 = vadd.s32 %v297, %v287
    %v299 = vadd.s32 %v298, %v289
    %v300 = vmul.u32 %v255, %v246
    %v301 = vadd.s32 %v277, %v296
    %vm302 = vc.u32 %v277, %v296
    %v303 = vadd.s32 %v299, 1
    %v304 = vsel %vm302, %v303, %v299
    %v305 = vadd.s32 %v300, %v304
    %v306 = vadd.s32 %v305, 536870912
    %v307 = vshrl.u32 %v306, 30
    %v308 = vshll.u32 %v307, 30
    %v309 = vsub.s32 %v305, %v308
    %vm310 = vcmp.lt.s32.totalorder %v309, 0
    %v311 = vsub.s32 0, %v309
    %v312 = vsel %vm310, %v311, %v309
    %v313 = vclz %v312
    %v314 = vsub.s32 %v313, 2
    %vm315 = vcmp.gt.s32.totalorder 0, %v314
    %v316 = vsel %vm315, 0, %v314
    %v317 = vsub.s32 32, %v316
    %v318 = vshll.u32 %v309, %v316
    %v319 = vshrl.u32 %v301, %v317
    %v320 = vor.u32 %v318, %v319
    %v321 = vsub.s32 4294967266, %v316
    %v322 = vadd.s32 %v321, 127
    %v323 = vshll.u32 %v322, 23
    %v324 = vor.u32 4788187, %v323
    %v325 = vand.u32 2147483647, %v324
    %v327 = vcvt.s32.f32 %v320
    %v328 = vmul.f32 %v327, %v325
    %v329 = vxor.u32 %v328, 2147483648
    %v330 = vsel %vm209, %v329, %v328
    %v331 = vsub.s32 4, %v307
    %v332 = vsel %vm209, %v331, %v307
    %v333 = vsel %vm208, %v50, %v330
    %v334 = vsel %vm208, 0, %v332
    %v335 = vmul.f32 %v333, %v333
    %v336 = vmul.f32 %v335, -0.001358992
    %v337 = vadd.f32 %v336, 0.041655596
    %v338 = vmul.f32 %v335, %v337
    %v339 = vadd.f32 %v338, -0.4999988
    %v340 = vmul.f32 %v335, %v339
    %v341 = vadd.f32 1.0, %v340
    %v342 = vmul.f32 %v333, %v333
    %v343 = vmul.f32 %v342, -0.00019511016
    %v344 = vadd.f32 %v343, 0.008332121
    %v345 = vmul.f32 %v342, %v344
    %v346 = vadd.f32 %v345, -0.16666654
    %v347 = vmul.f32 %v342, %v346
    %v348 = vadd.f32 %v347, 1.0
    %v349 = vmul.f32 %v348, %v333
    %vm350 = vweird.f32 %v50
    %v351 = vadd.s32 %v334, 3
    %v352 = vand.u32 %v351, 3
    %vm353 = vcmp.lt.s32.totalorder %v352, 2
    %vm354 = vcmp.eq.s32.totalorder %v352, 0
    %v355 = vxor.u32 %v349, 2147483648
    %v356 = vsel %vm354, %v341, %v355
    %vm357 = vcmp.eq.s32.totalorder %v352, 2
    %v358 = vxor.u32 %v341, 2147483648
    %v359 = vsel %vm357, %v358, %v349
    %v360 = vsel %vm353, %v356, %v359
    %v361 = vsel %vm350, nan, %v360
    %362 = vst [vmem:[#allocation2] sm:$0xff] %v206
    %363 = vst [vmem:[#allocation2 + $0x8] sm:$0xff] %v361
    // Predicated region
    $region14: #{tpu_custom_call.1} parent=1 // pred_check
      _
    $region15: #{tpu_custom_call.1} parent=1 // pred_check_branch
      %365 = sbr.rel (0) target = $region17
    $region16: #{tpu_custom_call.1} parent=1 // pred_region
      %367 = vsyncadd [#allocation3], 0
      %s368 = sshll.u32 [#allocation2], 4
      %s369 = int_to_ptr.vmem [resolvable:$true] %s368
      %s370 = sshll.u32 %s3, 4
      %s371 = int_to_ptr.hbm [resolvable:$true] %s370
      %376 = dma.vmem_to_hbm [thread:$0]  %s369, 256, %s371, [#allocation3], 128, 128, 8
    $region17: #{tpu_custom_call.1} parent=1 // pred_fallthru
      _
    // Predicated region
    $region18: #{tpu_custom_call.1} parent=1 // pred_check
      _
    $region19: #{tpu_custom_call.1} parent=1 // pred_check_branch
      %378 = sbr.rel (0) target = $region21
    $region20: #{tpu_custom_call.1} parent=1 // pred_region
      %380 = dma.done [#allocation3], 256
    $region21: #{tpu_custom_call.1} parent=1 // pred_fallthru
      _
    %381 = vsyncpa [#allocation3], 1

</llo_original>
